<compile_context>
chip_gen: v7x
topology: tpu7x:2x2x1
jax: 0.10.0
libtpu: 0.0.40
codegen_flags: <defaults>
</compile_context>

<pallas_src>
import jax
import jax.numpy as jnp
from jax.experimental import pallas as pl
from jax.experimental.pallas import tpu as pltpu

_COS_EPS = 1e-8      # torch.nn.CosineSimilarity default eps
_CLAMP = 0.99999     # clamp used by great_circle_distance
_MAX_TB = 2048       # rows per tile cap (multi-MiB tiles even at small D)


def _triplet_cos_kernel(a_ref, p_ref, n_ref, out_ref):
    """Per-row clamped cosine(anchor, positive) and cosine(anchor, negative)."""
    # Cast after the DMA so bf16 inputs travel at half the HBM bytes.
    a = a_ref[...].astype(jnp.float32)
    p = p_ref[...].astype(jnp.float32)
    n = n_ref[...].astype(jnp.float32)

    # Row-wise reductions over the feature (lane) axis: VPU multiplies + XLU reduce.
    a_sq = jnp.sum(a * a, axis=1, keepdims=True)
    p_sq = jnp.sum(p * p, axis=1, keepdims=True)
    n_sq = jnp.sum(n * n, axis=1, keepdims=True)
    dot_ap = jnp.sum(a * p, axis=1, keepdims=True)
    dot_an = jnp.sum(a * n, axis=1, keepdims=True)

    # cos = dot / max(|a||b|, eps)  ==  dot * rsqrt(max(|a|^2 |b|^2, eps^2))
    eps_sq = jnp.float32(_COS_EPS * _COS_EPS)
    cos_p = dot_ap * jax.lax.rsqrt(jnp.maximum(a_sq * p_sq, eps_sq))
    cos_n = dot_an * jax.lax.rsqrt(jnp.maximum(a_sq * n_sq, eps_sq))

    # Single fused store for both columns (avoids two lane-masked partial stores).
    out_ref[...] = jnp.concatenate(
        [jnp.clip(cos_p, -_CLAMP, _CLAMP), jnp.clip(cos_n, -_CLAMP, _CLAMP)],
        axis=1,
    )


def _vmem_capacity_bytes():
    """Per-TensorCore VMEM, with a conservative (v7x-sized) fallback."""
    try:
        return int(pltpu.get_tpu_info().vmem_capacity_bytes)
    except Exception:
        return 64 * 1024 * 1024


def _pick_row_tile(batch, feat, itemsize, tile_budget, two_core):
    """Rows per tile: biggest under the double-buffered VMEM budget, balanced for 2 TCs."""
    # 3 inputs x double-buffer in native dtype + 3 full-tile f32 working copies per row.
    row_bytes = 3 * 2 * feat * itemsize + 3 * feat * 4
    tb = tile_budget // max(row_bytes, 1)
    tb = max(8, min(_MAX_TB, (tb // 8) * 8))           # sublane-aligned

    if two_core and batch >= 32:
        # Aim for >= 4 grid steps so both TensorCores get balanced, pipelined work.
        tb_bal = ((-(-batch // 4)) + 7) // 8 * 8
        if tb_bal >= 8:
            tb = min(tb, tb_bal)

    if batch <= tb:
        return batch                                   # single full-batch tile (full dims OK)

    steps = -(-batch // tb)
    if two_core and steps > 1 and steps % 2 == 1:
        # Nudge to an even step count so the two TensorCores split tiles evenly.
        tb_even = ((-(-batch // (steps + 1))) + 7) // 8 * 8
        if tb_even >= 8:
            tb = tb_even
    return tb


def triplet_angle_loss(anchor, positive, negative, margin):
    """Pallas-backed TripletAngleLoss.forward: returns a scalar (mean loss)."""
    B, D = anchor.shape
    itemsize = jnp.dtype(anchor.dtype).itemsize

    vmem_cap = _vmem_capacity_bytes()
    small_vmem = vmem_cap <= 64 * 1024 * 1024           # v7x-like (64 MiB / TC, 2 TCs)
    tile_budget = (24 if small_vmem else 56) * 1024 * 1024
    vmem_limit = (48 if small_vmem else 96) * 1024 * 1024
    two_core = small_vmem

    tb = _pick_row_tile(B, D, itemsize, tile_budget, two_core)
    grid = (pl.cdiv(B, tb),)                            # partial last block handled by Pallas

    in_spec = pl.BlockSpec((tb, D), lambda i: (i, 0))
    out_spec = pl.BlockSpec((tb, 2), lambda i: (i, 0))

    cost = pl.CostEstimate(
        flops=10 * B * D,                               # 5 fused mul-add reductions per row
        transcendentals=2 * B,                          # 2 rsqrt per row
        bytes_accessed=3 * B * D * itemsize + 8 * B,    # 3 input streams + (B,2) f32 output
    )

    cos = pl.pallas_call(
        _triplet_cos_kernel,
        out_shape=jax.ShapeDtypeStruct((B, 2), jnp.float32),
        grid=grid,
        in_specs=[in_spec, in_spec, in_spec],
        out_specs=out_spec,
        cost_estimate=cost,
        compiler_params=pltpu.CompilerParams(
            dimension_semantics=("parallel",),          # shard row tiles across TCs (v7x)
            vmem_limit_bytes=vmem_limit,
        ),
    )(anchor, positive, negative)

    # Tail: angular distance, hinge, square, mean (O(B) work). Garbage rows of the partial
    # last tile are never stored (out-of-bounds stores discarded), so `cos` is exactly (B, 2).
    dist_p = jnp.arccos(cos[:, 0])
    dist_n = jnp.arccos(cos[:, 1])
    losses = jnp.maximum(dist_p + margin - dist_n, 0.0) ** 2
    return jnp.mean(losses)


def _reference(anchor, positive, negative, margin):
    """Pure-JAX reference mirroring the PyTorch module."""
    anchor = anchor.astype(jnp.float32)
    positive = positive.astype(jnp.float32)
    negative = negative.astype(jnp.float32)

    def cos(a, b):
        num = jnp.sum(a * b, axis=1)
        den = jnp.maximum(
            jnp.linalg.norm(a, axis=1) * jnp.linalg.norm(b, axis=1), _COS_EPS
        )
        return jnp.clip(num / den, -_CLAMP, _CLAMP)

    dp = jnp.arccos(cos(anchor, positive))
    dn = jnp.arccos(cos(anchor, negative))
    return jnp.mean(jnp.maximum(dp + margin - dn, 0.0) ** 2)


if __name__ == "__main__":
    margin = 0.5  # TripletAngleLoss(margin=0.5); module has no learnable params
    loss_fn = jax.jit(triplet_angle_loss, static_argnums=3)

    # --- case 1: small f32 problem (B=8, D=32) ---
    k_a, k_p, k_n = jax.random.split(jax.random.PRNGKey(0), 3)
    anchor = jax.random.normal(k_a, (8, 32), dtype=jnp.float32)
    positive = jax.random.normal(k_p, (8, 32), dtype=jnp.float32)
    negative = jax.random.normal(k_n, (8, 32), dtype=jnp.float32)

    loss = jax.block_until_ready(loss_fn(anchor, positive, negative, margin))
    ref = _reference(anchor, positive, negative, margin)
    assert jnp.allclose(loss, ref, rtol=1e-4, atol=1e-4), (loss, ref)

    # --- case 2: bf16 inputs (in-kernel cast path), non-multiple-of-8 batch ---
    k_a, k_p, k_n = jax.random.split(jax.random.PRNGKey(1), 3)
    a2 = jax.random.normal(k_a, (20, 64), dtype=jnp.bfloat16)
    p2 = jax.random.normal(k_p, (20, 64), dtype=jnp.bfloat16)
    n2 = jax.random.normal(k_n, (20, 64), dtype=jnp.bfloat16)

    loss2 = jax.block_until_ready(loss_fn(a2, p2, n2, margin))
    ref2 = _reference(a2, p2, n2, margin)
    assert jnp.allclose(loss2, ref2, rtol=1e-4, atol=1e-4), (loss2, ref2)

    # --- case 3: multi-tile grid with a partial (unpadded) last block ---
    k_a, k_p, k_n = jax.random.split(jax.random.PRNGKey(2), 3)
    a3 = jax.random.normal(k_a, (2100, 128), dtype=jnp.float32)
    p3 = jax.random.normal(k_p, (2100, 128), dtype=jnp.float32)
    n3 = jax.random.normal(k_n, (2100, 128), dtype=jnp.float32)

    loss3 = jax.block_until_ready(loss_fn(a3, p3, n3, margin))
    ref3 = _reference(a3, p3, n3, margin)
    assert jnp.allclose(loss3, ref3, rtol=1e-4, atol=1e-4), (loss3, ref3)

    print("KERNEL_OK")
</pallas_src>

<mosaic_0001>
module attributes {stable_mosaic.version = 11 : i64} {
  func.func @_triplet_cos_kernel(%arg0: i32, %arg1: memref<8x32xf32, #tpu.memory_space<vmem>>, %arg2: memref<8x32xf32, #tpu.memory_space<vmem>>, %arg3: memref<8x32xf32, #tpu.memory_space<vmem>>, %arg4: memref<8x2xf32, #tpu.memory_space<vmem>>) attributes {dimension_semantics = [#tpu.dimension_semantics<parallel>], iteration_bounds = array<i64: 1>, scalar_prefetch = 0 : i64, scratch_operands = 0 : i64, tpu.core_type = #tpu.core_type<tc>, window_params = [{transform_indices = @transform_0, window_bounds = array<i64: 8, 32>}, {transform_indices = @transform_1, window_bounds = array<i64: 8, 32>}, {transform_indices = @transform_2, window_bounds = array<i64: 8, 32>}, {transform_indices = @transform_3, window_bounds = array<i64: 8, 2>}]} {
    %c0 = arith.constant 0 : index
    %c0_0 = arith.constant 0 : index
    %0 = vector.load %arg1[%c0, %c0_0] : memref<8x32xf32, #tpu.memory_space<vmem>>, vector<8x32xf32>
    %c0_1 = arith.constant 0 : index
    %c0_2 = arith.constant 0 : index
    %1 = vector.load %arg2[%c0_1, %c0_2] : memref<8x32xf32, #tpu.memory_space<vmem>>, vector<8x32xf32>
    %c0_3 = arith.constant 0 : index
    %c0_4 = arith.constant 0 : index
    %2 = vector.load %arg3[%c0_3, %c0_4] : memref<8x32xf32, #tpu.memory_space<vmem>>, vector<8x32xf32>
    %3 = arith.mulf %0, %0 : vector<8x32xf32>
    %cst = arith.constant dense<0.000000e+00> : vector<8xf32>
    %4 = vector.multi_reduction <add>, %3, %cst [1] : vector<8x32xf32> to vector<8xf32>
    %5 = vector.shape_cast %4 : vector<8xf32> to vector<8x1xf32>
    %6 = arith.mulf %1, %1 : vector<8x32xf32>
    %cst_5 = arith.constant dense<0.000000e+00> : vector<8xf32>
    %7 = vector.multi_reduction <add>, %6, %cst_5 [1] : vector<8x32xf32> to vector<8xf32>
    %8 = vector.shape_cast %7 : vector<8xf32> to vector<8x1xf32>
    %9 = arith.mulf %2, %2 : vector<8x32xf32>
    %cst_6 = arith.constant dense<0.000000e+00> : vector<8xf32>
    %10 = vector.multi_reduction <add>, %9, %cst_6 [1] : vector<8x32xf32> to vector<8xf32>
    %11 = vector.shape_cast %10 : vector<8xf32> to vector<8x1xf32>
    %12 = arith.mulf %0, %1 : vector<8x32xf32>
    %cst_7 = arith.constant dense<0.000000e+00> : vector<8xf32>
    %13 = vector.multi_reduction <add>, %12, %cst_7 [1] : vector<8x32xf32> to vector<8xf32>
    %14 = vector.shape_cast %13 : vector<8xf32> to vector<8x1xf32>
    %15 = arith.mulf %0, %2 : vector<8x32xf32>
    %cst_8 = arith.constant dense<0.000000e+00> : vector<8xf32>
    %16 = vector.multi_reduction <add>, %15, %cst_8 [1] : vector<8x32xf32> to vector<8xf32>
    %17 = vector.shape_cast %16 : vector<8xf32> to vector<8x1xf32>
    %18 = arith.mulf %5, %8 : vector<8x1xf32>
    %cst_9 = arith.constant 1.000000e-16 : f32
    %19 = vector.broadcast %cst_9 : f32 to vector<8x1xf32>
    %20 = arith.maximumf %18, %19 : vector<8x1xf32>
    %21 = math.rsqrt %20 : vector<8x1xf32>
    %22 = arith.mulf %14, %21 : vector<8x1xf32>
    %23 = arith.mulf %5, %11 : vector<8x1xf32>
    %cst_10 = arith.constant 1.000000e-16 : f32
    %24 = vector.broadcast %cst_10 : f32 to vector<8x1xf32>
    %25 = arith.maximumf %23, %24 : vector<8x1xf32>
    %26 = math.rsqrt %25 : vector<8x1xf32>
    %27 = arith.mulf %17, %26 : vector<8x1xf32>
    %cst_11 = arith.constant -0.999989986 : f32
    %cst_12 = arith.constant 0.999989986 : f32
    %28 = vector.broadcast %cst_11 : f32 to vector<8x1xf32>
    %29 = arith.maximumf %28, %22 : vector<8x1xf32>
    %30 = vector.broadcast %cst_12 : f32 to vector<8x1xf32>
    %31 = arith.minimumf %30, %29 : vector<8x1xf32>
    %cst_13 = arith.constant -0.999989986 : f32
    %cst_14 = arith.constant 0.999989986 : f32
    %32 = vector.broadcast %cst_13 : f32 to vector<8x1xf32>
    %33 = arith.maximumf %32, %27 : vector<8x1xf32>
    %34 = vector.broadcast %cst_14 : f32 to vector<8x1xf32>
    %35 = arith.minimumf %34, %33 : vector<8x1xf32>
    %36 = tpu.concatenate %31, %35 in 1 : vector<8x1xf32>, vector<8x1xf32> -> vector<8x2xf32>
    %c0_15 = arith.constant 0 : index
    %c0_16 = arith.constant 0 : index
    %37 = vector.load %arg4[%c0_15, %c0_16] : memref<8x2xf32, #tpu.memory_space<vmem>>, vector<8x2xf32>
    tpu.vector_store %arg4[%c0_15, %c0_16], %36 {strides = array<i32>} : memref<8x2xf32, #tpu.memory_space<vmem>>, vector<8x2xf32>,
    return
  }
  func.func @transform_0(%arg0: i32) -> (i32, i32) {
    %c0_i32 = arith.constant 0 : i32
    %c0_i32_0 = arith.constant 0 : i32
    return %arg0, %c0_i32 : i32, i32
  }
  func.func @transform_1(%arg0: i32) -> (i32, i32) {
    %c0_i32 = arith.constant 0 : i32
    %c0_i32_0 = arith.constant 0 : i32
    return %arg0, %c0_i32 : i32, i32
  }
  func.func @transform_2(%arg0: i32) -> (i32, i32) {
    %c0_i32 = arith.constant 0 : i32
    %c0_i32_0 = arith.constant 0 : i32
    return %arg0, %c0_i32 : i32, i32
  }
  func.func @transform_3(%arg0: i32) -> (i32, i32) {
    %c0_i32 = arith.constant 0 : i32
    %c0_i32_0 = arith.constant 0 : i32
    return %arg0, %c0_i32 : i32, i32
  }
}

</mosaic_0001>

<llo_original>
// kernel: triplet_angle_loss.1
$region0: #{triplet_angle_loss.1}
  #allocation0 [shape = 'u32[]', space=smem, size = 0x4, offset = 0x4, fixed_abs, tag = 'smem constant byte address 0x4 - core index']
  #allocation1 [shape = 'u32[144,128]{1,0:T(1,128)}', space=vmem, size = 0x12000, scoped, tag = 'internal scratch']
  %s0 = inlined_call_operand.hbm [shape: f32[8,32], index: 0, kind: input, shape index: {}]
  %s1 = inlined_call_operand.hbm [shape: f32[8,32], index: 1, kind: input, shape index: {}]
  %s2 = inlined_call_operand.hbm [shape: f32[8,32], index: 2, kind: input, shape index: {}]
  %s3 = inlined_call_operand.vmem [shape: f32[8,2], index: 3, kind: output, shape index: {}]
  %s4 = sld [smem:[#allocation0]]
  $region34: #{triplet_angle_loss.1} parent=0
    _
  %s6 = ssub.s32 1, %s4
  %s7 = scalar_select 0, %s6, %s4
  $region1: #{triplet_angle_loss.1} parent=0
    #allocation2 [shape = 'u8[4096]{0}', space=vmem, size = 0x1000, scoped, tag = 'input window, operand 0, single buffered']
    #allocation3 [shape = 's32[1]{0}', space=sflag, size = 0x4, scoped, tag = 'scoped memory for triplet_angle_loss.1']
    #allocation4 [shape = 'u8[4096]{0}', space=vmem, size = 0x1000, scoped, tag = 'input window, operand 1, single buffered']
    #allocation5 [shape = 's32[1]{0}', space=sflag, size = 0x4, scoped, tag = 'scoped memory for triplet_angle_loss.1']
    #allocation6 [shape = 'u8[4096]{0}', space=vmem, size = 0x1000, scoped, tag = 'input window, operand 2, single buffered']
    %8 = vsyncpa [#allocation3], 0
    %9 = vsyncpa [#allocation5], 0
    // Predicated region
    $region2: #{triplet_angle_loss.1} parent=1 // pred_check
      _
    $region3: #{triplet_angle_loss.1} parent=1 // pred_check_branch
      %11 = sbr.rel (0) target = $region5
    $region4: #{triplet_angle_loss.1} parent=1 // pred_region
      %s13 = ssub.s32 128, 128
      %14 = vsyncadd [#allocation3], %s13
      %s16 = sshll.u32 [#allocation2], 4
      %s17 = int_to_ptr.vmem [resolvable:$true] %s16
      %19 = dma.hbm_to_vmem [thread:$0]  %s0, 128, %s17, [#allocation3]
    $region5: #{triplet_angle_loss.1} parent=1 // pred_fallthru
      _
    // Predicated region
    $region6: #{triplet_angle_loss.1} parent=1 // pred_check
      _
    $region7: #{triplet_angle_loss.1} parent=1 // pred_check_branch
      %21 = sbr.rel (0) target = $region9
    $region8: #{triplet_angle_loss.1} parent=1 // pred_region
      %s23 = ssub.s32 128, 128
      %24 = vsyncadd [#allocation5], %s23
      %s26 = sshll.u32 [#allocation4], 4
      %s27 = int_to_ptr.vmem [resolvable:$true] %s26
      %29 = dma.hbm_to_vmem [thread:$0]  %s1, 128, %s27, [#allocation5]
    $region9: #{triplet_angle_loss.1} parent=1 // pred_fallthru
      _
    // Predicated region
    $region10: #{triplet_angle_loss.1} parent=1 // pred_check
      _
    $region11: #{triplet_angle_loss.1} parent=1 // pred_check_branch
      %31 = sbr.rel (0) target = $region13
    $region12: #{triplet_angle_loss.1} parent=1 // pred_region
      %s33 = ssub.s32 128, 128
      %34 = vsyncadd [#allocation5], %s33
      %s36 = sshll.u32 [#allocation6], 4
      %s37 = int_to_ptr.vmem [resolvable:$true] %s36
      %39 = dma.hbm_to_vmem [thread:$0]  %s2, 128, %s37, [#allocation5]
    $region13: #{triplet_angle_loss.1} parent=1 // pred_fallthru
      _
    // Predicated region
    $region14: #{triplet_angle_loss.1} parent=1 // pred_check
      _
    $region15: #{triplet_angle_loss.1} parent=1 // pred_check_branch
      %41 = sbr.rel (0) target = $region17
    $region16: #{triplet_angle_loss.1} parent=1 // pred_region
      %42 = dma.done [#allocation3], 128
    $region17: #{triplet_angle_loss.1} parent=1 // pred_fallthru
      _
    // Predicated region
    $region18: #{triplet_angle_loss.1} parent=1 // pred_check
      _
    $region19: #{triplet_angle_loss.1} parent=1 // pred_check_branch
      %44 = sbr.rel (0) target = $region21
    $region20: #{triplet_angle_loss.1} parent=1 // pred_region
      %45 = dma.done [#allocation5], 128
    $region21: #{triplet_angle_loss.1} parent=1 // pred_fallthru
      _
    // Predicated region
    $region22: #{triplet_angle_loss.1} parent=1 // pred_check
      _
    $region23: #{triplet_angle_loss.1} parent=1 // pred_check_branch
      %47 = sbr.rel (0) target = $region25
    $region24: #{triplet_angle_loss.1} parent=1 // pred_region
      %48 = dma.done [#allocation5], 128
    $region25: #{triplet_angle_loss.1} parent=1 // pred_fallthru
      _
    %v49 = vld [vmem:[#allocation2] sm:$0xff]
    %v50 = vld [vmem:[#allocation4] sm:$0xff]
    %v51 = vld [vmem:[#allocation6] sm:$0xff]
    %v52 = vmul.f32 %v49, %v49
    %vm53 = vcmask 261120
    %v54 = vsel %vm53, %v52, 0.0
    %55 = vadd.xlane.f32.xlu0 %v54
    %v56 = vpop.xlane.xlu0 %55
    %v57 = vmul.f32 %v50, %v50
    %v58 = vsel %vm53, %v57, 0.0
    %59 = vadd.xlane.f32.xlu0 %v58
    %v60 = vpop.xlane.xlu0 %59
    %v61 = vmul.f32 %v51, %v51
    %v62 = vsel %vm53, %v61, 0.0
    %63 = vadd.xlane.f32.xlu0 %v62
    %v64 = vpop.xlane.xlu0 %63
    %v65 = vmul.f32 %v49, %v50
    %v66 = vsel %vm53, %v65, 0.0
    %67 = vadd.xlane.f32.xlu0 %v66
    %v68 = vpop.xlane.xlu0 %67
    %v69 = vmul.f32 %v49, %v51
    %v70 = vsel %vm53, %v69, 0.0
    %71 = vadd.xlane.f32.xlu0 %v70
    %v72 = vpop.xlane.xlu0 %71
    %v73 = vmul.f32 %v56, %v60
    %v74 = vmax.f32 %v73, 1e-16
    %v75 = vrsqrt.pop %v74
    %v76 = vmul.f32 %v68, %v75
    %v77 = vmul.f32 %v56, %v64
    %v78 = vmax.f32 %v77, 1e-16
    %v79 = vrsqrt.pop %v78
    %v80 = vmul.f32 %v72, %v79
    %v81 = vmax.f32 %v76, -0.99999
    %v82 = vmin.f32 %v81, 0.99999
    %v83 = vmax.f32 %v80, -0.99999
    %v84 = vmin.f32 %v83, 0.99999
    %vm85 = vcmask 7168
    %v86 = vsel %vm85, %v82, %v84
    %vm87 = vcmask 15360
    %88 = vst.msk [vmem:[%s3] sm:$0xff] %vm87, %v86
    // Predicated region
    $region26: #{triplet_angle_loss.1} parent=1 // pred_check
      _
    $region27: #{triplet_angle_loss.1} parent=1 // pred_check_branch
      %90 = sbr.rel (0) target = $region29
    $region28: #{triplet_angle_loss.1} parent=1 // pred_region
      _
    $region29: #{triplet_angle_loss.1} parent=1 // pred_fallthru
      _
    // Predicated region
    $region30: #{triplet_angle_loss.1} parent=1 // pred_check
      _
    $region31: #{triplet_angle_loss.1} parent=1 // pred_check_branch
      %92 = sbr.rel (0) target = $region33
    $region32: #{triplet_angle_loss.1} parent=1 // pred_region
      _
    $region33: #{triplet_angle_loss.1} parent=1 // pred_fallthru
      _
    %93 = vsyncpa [#allocation3], 1
    %94 = vsyncpa [#allocation5], 1

</llo_original>
